<compile_context>
chip_gen: v7x
topology: tpu7x:2x2x1
jax: 0.10.0
libtpu: 0.0.40
codegen_flags: <defaults>
</compile_context>

<pallas_src>
import functools

import jax
import jax.numpy as jnp
from jax.experimental import pallas as pl
from jax.experimental.pallas import tpu as pltpu

ALPHA = 1.0
MARGIN = 1.0
EPS = 1e-6                              # torch pairwise_distance default eps
_PER_STEP_TARGET = 4 * 1024 * 1024      # ~4 MiB of input bytes per grid step


def _round_up(x, m):
    return ((x + m - 1) // m) * m


def _cdiv(a, b):
    return (a + b - 1) // b


def _sublane_mult(dtype):
    # rows per packed sublane tile: 8 for f32, 16 for bf16, 32 for int8/fp8
    return max(8, 32 // jnp.dtype(dtype).itemsize)


def _tpu_vmem_bytes():
    try:
        return int(pltpu.get_tpu_info().vmem_capacity_bytes)
    except Exception:
        return 64 * 1024 * 1024         # conservative (v7x per-TC VMEM)


def _finalize_rows(i, tb, batch, alpha, margin, ce_rows,
                   f0_ref, f1_ref, f2_ref, out_ref):
    """Triplet loss + fused masked reduction + lane-dense partial write."""
    a = f0_ref[...]
    p = f1_ref[...]
    n = f2_ref[...]
    if a.dtype != jnp.float32:
        a = a.astype(jnp.float32)
        p = p.astype(jnp.float32)
        n = n.astype(jnp.float32)

    d_ap = jnp.sqrt(jnp.sum((a - p + EPS) ** 2, axis=-1, keepdims=True))   # [TB,1]
    d_an = jnp.sqrt(jnp.sum((a - n + EPS) ** 2, axis=-1, keepdims=True))   # [TB,1]
    trip_rows = jnp.maximum(d_ap - d_an + margin, 0.0)                     # [TB,1]

    # fused mask + reduce: one select, one sublane reduce
    row_ids = i * tb + jax.lax.broadcasted_iota(jnp.int32, (tb, 1), 0)
    valid = row_ids < batch
    tile_rows = jnp.where(valid, ce_rows + alpha * trip_rows, 0.0)
    out_ref[...] = jnp.full(out_ref.shape, jnp.sum(tile_rows),
                            dtype=out_ref.dtype)


def _loss_kernel_fused(x0_ref, tgt_ref, f0_ref, f1_ref, f2_ref, out_ref,
                       *, alpha, margin, batch):
    """Single-pass path: whole class axis resident in one (tb, C) block."""
    i = pl.program_id(0)

    x = x0_ref[...]                               # [TB, C]
    if x.dtype != jnp.float32:
        x = x.astype(jnp.float32)
    tgt = tgt_ref[...]                            # [TB, 1] int32
    tb, c = x.shape

    m = jnp.max(x, axis=-1, keepdims=True)                                  # [TB,1]
    e = jnp.exp(x - m)                                                      # [TB,C]
    sum_e = jnp.sum(e, axis=-1, keepdims=True)                              # [TB,1]
    cols = jax.lax.broadcasted_iota(jnp.int32, (tb, c), 1)                  # [TB,C]
    picked = jnp.sum(jnp.where(cols == tgt, x, 0.0), axis=-1, keepdims=True)
    ce_rows = m + jnp.log(sum_e) - picked                                   # [TB,1]

    _finalize_rows(i, tb, batch, alpha, margin, ce_rows,
                   f0_ref, f1_ref, f2_ref, out_ref)


def _loss_kernel_streaming(x0_ref, tgt_ref, f0_ref, f1_ref, f2_ref, out_ref,
                           m_sc, l_sc, p_sc,
                           *, alpha, margin, batch, num_classes):
    """Large-vocab path: class axis tiled, online/streaming logsumexp."""
    i = pl.program_id(0)      # batch tile ("parallel")
    k = pl.program_id(1)      # class tile ("arbitrary", reduction)

    @pl.when(k == 0)
    def _():
        m_sc[...] = jnp.full_like(m_sc, -jnp.inf)
        l_sc[...] = jnp.zeros_like(l_sc)
        p_sc[...] = jnp.zeros_like(p_sc)

    x = x0_ref[...]                               # [TB, TC]
    if x.dtype != jnp.float32:
        x = x.astype(jnp.float32)
    tgt = tgt_ref[...]                            # [TB, 1] int32
    tb, tc = x.shape

    # global class ids for this tile; mask padded class columns
    cols = k * tc + jax.lax.broadcasted_iota(jnp.int32, (tb, tc), 1)        # [TB,TC]
    col_valid = cols < num_classes
    x_m = jnp.where(col_valid, x, -jnp.inf)

    # online logsumexp update
    m_prev = m_sc[...]
    m_new = jnp.maximum(m_prev, jnp.max(x_m, axis=-1, keepdims=True))       # [TB,1]
    scale = jnp.where(m_new == -jnp.inf, 0.0, jnp.exp(m_prev - m_new))
    e = jnp.where(col_valid, jnp.exp(x_m - m_new), 0.0)                     # [TB,TC]
    l_sc[...] = scale * l_sc[...] + jnp.sum(e, axis=-1, keepdims=True)
    m_sc[...] = m_new
    # the target column lies in exactly one class tile
    p_sc[...] = p_sc[...] + jnp.sum(jnp.where(cols == tgt, x, 0.0),
                                    axis=-1, keepdims=True)

    @pl.when(k == pl.num_programs(1) - 1)
    def _():
        ce_rows = m_sc[...] + jnp.log(l_sc[...]) - p_sc[...]
        _finalize_rows(i, tb, batch, alpha, margin, ce_rows,
                       f0_ref, f1_ref, f2_ref, out_ref)


@functools.partial(jax.jit,
                   static_argnames=("alpha", "margin", "max_step_bytes"))
def ce_with_triplet_loss(x0, target, f0, f1, f2, *, alpha=ALPHA,
                         margin=MARGIN, max_step_bytes=None):
    """Training-mode forward of CE_with_TripletLoss. Returns a scalar."""
    B, C = x0.shape
    D = f0.shape[-1]
    tgt2d = target.astype(jnp.int32).reshape(-1, 1)       # 2-D for TPU tiling

    x_isz = jnp.dtype(x0.dtype).itemsize
    f_isz = jnp.dtype(f0.dtype).itemsize
    sub_mult = max(_sublane_mult(x0.dtype), _sublane_mult(f0.dtype),
                   _sublane_mult(f1.dtype), _sublane_mult(f2.dtype), 8)

    # ---- generation-aware VMEM budgets ----------------------------------
    vmem_cap = _tpu_vmem_bytes()                 # 64 MiB v7x, 128 MiB v5e/v6e
    input_budget = (vmem_cap * 3) // 8           # double-buffered input budget
    step_target = _PER_STEP_TARGET if max_step_bytes is None else int(max_step_bytes)
    per_step_cap = max(1, min(step_target, input_budget // 2))

    # ---- per-row VMEM footprint (lane-padded, real dtypes) ---------------
    fixed_row = (3 * _round_up(D, 128) * f_isz   # anchor / positive / negative
                 + 128 * 4)                      # (tb,1) int32 target -> 128 lanes
    logits_row_full = _round_up(C, 128) * x_isz
    row_bytes_full = fixed_row + logits_row_full

    b_ceil = _round_up(B, sub_mult)
    # keep >= 2 batch tiles when possible: "parallel" axis shards across
    # v7x's two TensorCores (harmless on 1-TC v5e/v6e)
    tb_max = max(sub_mult, min(b_ceil, _round_up(_cdiv(B, 2), sub_mult)))

    tb_full = max(sub_mult,
                  (per_step_cap // row_bytes_full) // sub_mult * sub_mult)

    # class-tile when keeping the whole class axis resident would force very
    # thin row tiles (or would not fit the per-step budget at all)
    class_tiled = C > 128 and (
        sub_mult * row_bytes_full > per_step_cap
        or tb_full < min(64, tb_max))

    if class_tiled:
        tb = min(256, tb_max)                    # 256 is a multiple of 8/16/32
        # ensure at least one 128-column class tile fits next to the features
        while tb > sub_mult and tb * (fixed_row + 128 * x_isz) > per_step_cap:
            tb -= sub_mult
        tc = (per_step_cap // tb - fixed_row) // x_isz
        tc = max(128, (tc // 128) * 128)
        tc = min(tc, _round_up(C, 128))
        c_pad = _round_up(C, tc)
        nc = c_pad // tc
        if nc == 1:                              # fits in one class tile after all
            class_tiled = False
    if not class_tiled:
        tb = min(tb_full, tb_max)
        tc = C
        c_pad = C
        nc = 1

    b_pad = _round_up(B, tb)
    nt = b_pad // tb

    # ---- pad ragged batch / class tails (padded rows & cols are masked) --
    if b_pad != B:
        pad = b_pad - B
        x0 = jnp.pad(x0, ((0, pad), (0, 0)))
        tgt2d = jnp.pad(tgt2d, ((0, pad), (0, 0)))
        f0 = jnp.pad(f0, ((0, pad), (0, 0)))
        f1 = jnp.pad(f1, ((0, pad), (0, 0)))
        f2 = jnp.pad(f2, ((0, pad), (0, 0)))
    if c_pad != C:
        x0 = jnp.pad(x0, ((0, 0), (0, c_pad - C)))

    per_step_bytes = tb * (fixed_row + _round_up(tc, 128) * x_isz)
    scratch_bytes = 3 * tb * 128 * 4 if class_tiled else 0
    vmem_limit = int(min(vmem_cap * 3 // 4,
                         max(32 << 20,
                             2 * per_step_bytes + scratch_bytes + (16 << 20))))

    if class_tiled:
        kernel = functools.partial(_loss_kernel_streaming, alpha=float(alpha),
                                   margin=float(margin), batch=B,
                                   num_classes=C)
        grid = (nt, nc)
        in_specs = [
            pl.BlockSpec((tb, tc), lambda i, k: (i, k)),   # logits (class-tiled)
            pl.BlockSpec((tb, 1), lambda i, k: (i, 0)),    # targets
            pl.BlockSpec((tb, D), lambda i, k: (i, 0)),    # anchor
            pl.BlockSpec((tb, D), lambda i, k: (i, 0)),    # positive
            pl.BlockSpec((tb, D), lambda i, k: (i, 0)),    # negative
        ]
        out_specs = pl.BlockSpec((1, 8, 128), lambda i, k: (i, 0, 0))
        scratch_shapes = [pltpu.VMEM((tb, 1), jnp.float32)] * 3   # m, l, picked
        dims = ("parallel", "arbitrary")
    else:
        kernel = functools.partial(_loss_kernel_fused, alpha=float(alpha),
                                   margin=float(margin), batch=B)
        grid = (nt,)
        in_specs = [
            pl.BlockSpec((tb, C), lambda i: (i, 0)),       # logits
            pl.BlockSpec((tb, 1), lambda i: (i, 0)),       # targets
            pl.BlockSpec((tb, D), lambda i: (i, 0)),       # anchor
            pl.BlockSpec((tb, D), lambda i: (i, 0)),       # positive
            pl.BlockSpec((tb, D), lambda i: (i, 0)),       # negative
        ]
        out_specs = pl.BlockSpec((1, 8, 128), lambda i: (i, 0, 0))
        scratch_shapes = []
        dims = ("parallel",)

    partials = pl.pallas_call(
        kernel,
        out_shape=jax.ShapeDtypeStruct((nt, 8, 128), jnp.float32),
        grid=grid,
        in_specs=in_specs,
        out_specs=out_specs,
        scratch_shapes=scratch_shapes,
        compiler_params=pltpu.CompilerParams(
            dimension_semantics=dims,
            vmem_limit_bytes=vmem_limit),
    )(x0, tgt2d, f0, f1, f2)

    # tiny final reduction (nt floats) + normalization by the TRUE batch size
    return jnp.sum(partials[:, 0, 0]) / jnp.float32(B)


def _reference(x0, target, f0, f1, f2, alpha=ALPHA, margin=MARGIN):
    """Pure-JAX reference matching PyTorch semantics."""
    x = x0.astype(jnp.float32)
    lse = jax.scipy.special.logsumexp(x, axis=-1)
    picked = jnp.take_along_axis(x, target[:, None], axis=-1)[:, 0]
    ce = jnp.mean(lse - picked)
    d_ap = jnp.sqrt(jnp.sum((f0 - f1 + EPS) ** 2, axis=-1))
    d_an = jnp.sqrt(jnp.sum((f0 - f2 + EPS) ** 2, axis=-1))
    trip = jnp.mean(jnp.maximum(d_ap - d_an + margin, 0.0))
    return ce + alpha * trip


if __name__ == "__main__":
    key = jax.random.PRNGKey(0)
    k_x, k_t, k_f0, k_f1, k_f2 = jax.random.split(key, 5)

    # ---- primary small-shape test (single-pass path) --------------------
    B, C, D = 8, 10, 32   # batch, num classes, feature dim
    x0 = jax.random.normal(k_x, (B, C), dtype=jnp.float32)          # logits data[0][0]
    target = jax.random.randint(k_t, (B,), 0, C, dtype=jnp.int32)   # class labels
    f0 = jax.random.normal(k_f0, (B, D), dtype=jnp.float32)         # anchor   data[0][1]
    f1 = jax.random.normal(k_f1, (B, D), dtype=jnp.float32)         # positive data[1][1]
    f2 = jax.random.normal(k_f2, (B, D), dtype=jnp.float32)         # negative data[2][1]

    loss = jax.block_until_ready(ce_with_triplet_loss(x0, target, f0, f1, f2))
    ref = _reference(x0, target, f0, f1, f2)
    assert jnp.allclose(loss, ref, rtol=1e-5, atol=1e-5), (loss, ref)

    # ---- ragged / multi-tile batch (B not a multiple of 8) --------------
    B2 = 13
    x0b = jax.random.normal(k_x, (B2, C), dtype=jnp.float32)
    tgb = jax.random.randint(k_t, (B2,), 0, C, dtype=jnp.int32)
    f0b = jax.random.normal(k_f0, (B2, D), dtype=jnp.float32)
    f1b = jax.random.normal(k_f1, (B2, D), dtype=jnp.float32)
    f2b = jax.random.normal(k_f2, (B2, D), dtype=jnp.float32)
    loss2 = jax.block_until_ready(ce_with_triplet_loss(x0b, tgb, f0b, f1b, f2b))
    ref2 = _reference(x0b, tgb, f0b, f1b, f2b)
    assert jnp.allclose(loss2, ref2, rtol=1e-5, atol=1e-5), (loss2, ref2)

    # ---- class-tiled streaming-logsumexp path (forced via tiny step cap) -
    C3 = 300
    x0c = jax.random.normal(k_x, (B2, C3), dtype=jnp.float32)
    tgc = jax.random.randint(k_t, (B2,), 0, C3, dtype=jnp.int32)
    loss3 = jax.block_until_ready(
        ce_with_triplet_loss(x0c, tgc, f0b, f1b, f2b, max_step_bytes=4096))
    ref3 = _reference(x0c, tgc, f0b, f1b, f2b)
    assert jnp.allclose(loss3, ref3, rtol=1e-5, atol=1e-5), (loss3, ref3)

    print("KERNEL_OK")
</pallas_src>

<mosaic_0001>
module attributes {stable_mosaic.version = 11 : i64} {
  func.func @_loss_kernel_fused(%arg0: i32, %arg1: memref<8x10xf32, #tpu.memory_space<vmem>>, %arg2: memref<8x1xi32, #tpu.memory_space<vmem>>, %arg3: memref<8x32xf32, #tpu.memory_space<vmem>>, %arg4: memref<8x32xf32, #tpu.memory_space<vmem>>, %arg5: memref<8x32xf32, #tpu.memory_space<vmem>>, %arg6: memref<1x8x128xf32, #tpu.memory_space<vmem>>) attributes {dimension_semantics = [#tpu.dimension_semantics<parallel>], iteration_bounds = array<i64: 1>, scalar_prefetch = 0 : i64, scratch_operands = 0 : i64, tpu.core_type = #tpu.core_type<tc>, window_params = [{transform_indices = @transform_0, window_bounds = array<i64: 8, 10>}, {transform_indices = @transform_1, window_bounds = array<i64: 8, 1>}, {transform_indices = @transform_2, window_bounds = array<i64: 8, 32>}, {transform_indices = @transform_3, window_bounds = array<i64: 8, 32>}, {transform_indices = @transform_4, window_bounds = array<i64: 8, 32>}, {transform_indices = @transform_5, window_bounds = array<i64: 1, 8, 128>}]} {
    %c0 = arith.constant 0 : index
    %c0_0 = arith.constant 0 : index
    %0 = vector.load %arg1[%c0, %c0_0] : memref<8x10xf32, #tpu.memory_space<vmem>>, vector<8x10xf32>
    %c0_1 = arith.constant 0 : index
    %c0_2 = arith.constant 0 : index
    %1 = vector.load %arg2[%c0_1, %c0_2] : memref<8x1xi32, #tpu.memory_space<vmem>>, vector<8x1xi32>
    %cst = arith.constant dense<0xFF800000> : vector<8xf32>
    %2 = vector.multi_reduction <maximumf>, %0, %cst [1] : vector<8x10xf32> to vector<8xf32>
    %3 = vector.shape_cast %2 : vector<8xf32> to vector<8x1xf32>
    %4 = vector.broadcast %3 : vector<8x1xf32> to vector<8x10xf32>
    %5 = arith.subf %0, %4 : vector<8x10xf32>
    %6 = math.exp %5 : vector<8x10xf32>
    %cst_3 = arith.constant dense<0.000000e+00> : vector<8xf32>
    %7 = vector.multi_reduction <add>, %6, %cst_3 [1] : vector<8x10xf32> to vector<8xf32>
    %8 = vector.shape_cast %7 : vector<8xf32> to vector<8x1xf32>
    %9 = tpu.iota {dimensions = array<i32: 1>} : vector<8x10xi32>
    %10 = vector.broadcast %1 : vector<8x1xi32> to vector<8x10xi32>
    %11 = arith.cmpi eq, %9, %10 : vector<8x10xi32>
    %cst_4 = arith.constant 0.000000e+00 : f32
    %12 = vector.broadcast %cst_4 : f32 to vector<8x10xf32>
    %13 = arith.select %11, %0, %12 : vector<8x10xi1>, vector<8x10xf32>
    %cst_5 = arith.constant dense<0.000000e+00> : vector<8xf32>
    %14 = vector.multi_reduction <add>, %13, %cst_5 [1] : vector<8x10xf32> to vector<8xf32>
    %15 = vector.shape_cast %14 : vector<8xf32> to vector<8x1xf32>
    %16 = math.log %8 : vector<8x1xf32>
    %17 = arith.addf %3, %16 : vector<8x1xf32>
    %18 = arith.subf %17, %15 : vector<8x1xf32>
    %c0_6 = arith.constant 0 : index
    %c0_7 = arith.constant 0 : index
    %19 = vector.load %arg3[%c0_6, %c0_7] : memref<8x32xf32, #tpu.memory_space<vmem>>, vector<8x32xf32>
    %c0_8 = arith.constant 0 : index
    %c0_9 = arith.constant 0 : index
    %20 = vector.load %arg4[%c0_8, %c0_9] : memref<8x32xf32, #tpu.memory_space<vmem>>, vector<8x32xf32>
    %c0_10 = arith.constant 0 : index
    %c0_11 = arith.constant 0 : index
    %21 = vector.load %arg5[%c0_10, %c0_11] : memref<8x32xf32, #tpu.memory_space<vmem>>, vector<8x32xf32>
    %22 = arith.subf %19, %20 : vector<8x32xf32>
    %cst_12 = arith.constant 9.99999997E-7 : f32
    %23 = vector.broadcast %cst_12 : f32 to vector<8x32xf32>
    %24 = arith.addf %22, %23 : vector<8x32xf32>
    %25 = arith.mulf %24, %24 : vector<8x32xf32>
    %cst_13 = arith.constant dense<0.000000e+00> : vector<8xf32>
    %26 = vector.multi_reduction <add>, %25, %cst_13 [1] : vector<8x32xf32> to vector<8xf32>
    %27 = vector.shape_cast %26 : vector<8xf32> to vector<8x1xf32>
    %28 = math.sqrt %27 : vector<8x1xf32>
    %29 = arith.subf %19, %21 : vector<8x32xf32>
    %cst_14 = arith.constant 9.99999997E-7 : f32
    %30 = vector.broadcast %cst_14 : f32 to vector<8x32xf32>
    %31 = arith.addf %29, %30 : vector<8x32xf32>
    %32 = arith.mulf %31, %31 : vector<8x32xf32>
    %cst_15 = arith.constant dense<0.000000e+00> : vector<8xf32>
    %33 = vector.multi_reduction <add>, %32, %cst_15 [1] : vector<8x32xf32> to vector<8xf32>
    %34 = vector.shape_cast %33 : vector<8xf32> to vector<8x1xf32>
    %35 = math.sqrt %34 : vector<8x1xf32>
    %36 = arith.subf %28, %35 : vector<8x1xf32>
    %cst_16 = arith.constant 1.000000e+00 : f32
    %37 = vector.broadcast %cst_16 : f32 to vector<8x1xf32>
    %38 = arith.addf %36, %37 : vector<8x1xf32>
    %cst_17 = arith.constant 0.000000e+00 : f32
    %39 = vector.broadcast %cst_17 : f32 to vector<8x1xf32>
    %40 = arith.maximumf %38, %39 : vector<8x1xf32>
    %c8_i32 = arith.constant 8 : i32
    %41 = arith.muli %arg0, %c8_i32 : i32
    %42 = tpu.iota {dimensions = array<i32: 0>} : vector<8x1xi32>
    %43 = vector.broadcast %41 : i32 to vector<8x1xi32>
    %44 = arith.addi %43, %42 : vector<8x1xi32>
    %c8_i32_18 = arith.constant 8 : i32
    %45 = vector.broadcast %c8_i32_18 : i32 to vector<8x1xi32>
    %46 = arith.cmpi slt, %44, %45 : vector<8x1xi32>
    %cst_19 = arith.constant 1.000000e+00 : f32
    %47 = vector.broadcast %cst_19 : f32 to vector<8x1xf32>
    %48 = arith.mulf %47, %40 : vector<8x1xf32>
    %49 = arith.addf %18, %48 : vector<8x1xf32>
    %cst_20 = arith.constant 0.000000e+00 : f32
    %50 = vector.broadcast %cst_20 : f32 to vector<8x1xf32>
    %51 = arith.select %46, %49, %50 : vector<8x1xi1>, vector<8x1xf32>
    %52 = vector.shape_cast %51 : vector<8x1xf32> to vector<1x8x1xf32>
    %cst_21 = arith.constant dense<0.000000e+00> : vector<1xf32>
    %53 = vector.multi_reduction <add>, %52, %cst_21 [1, 2] : vector<1x8x1xf32> to vector<1xf32>
    %54 = vector.shape_cast %53 : vector<1xf32> to vector<1x1x1xf32>
    %55 = vector.extract %54[0, 0, 0] : f32 from vector<1x1x1xf32>
    %56 = vector.broadcast %55 : f32 to vector<1x8x128xf32>
    %c0_22 = arith.constant 0 : index
    %c0_23 = arith.constant 0 : index
    %c0_24 = arith.constant 0 : index
    %57 = vector.load %arg6[%c0_22, %c0_23, %c0_24] : memref<1x8x128xf32, #tpu.memory_space<vmem>>, vector<1x8x128xf32>
    tpu.vector_store %arg6[%c0_22, %c0_23, %c0_24], %56 {strides = array<i32>} : memref<1x8x128xf32, #tpu.memory_space<vmem>>, vector<1x8x128xf32>,
    return
  }
  func.func @transform_0(%arg0: i32) -> (i32, i32) {
    %c0_i32 = arith.constant 0 : i32
    %c0_i32_0 = arith.constant 0 : i32
    return %arg0, %c0_i32 : i32, i32
  }
  func.func @transform_1(%arg0: i32) -> (i32, i32) {
    %c0_i32 = arith.constant 0 : i32
    %c0_i32_0 = arith.constant 0 : i32
    return %arg0, %c0_i32 : i32, i32
  }
  func.func @transform_2(%arg0: i32) -> (i32, i32) {
    %c0_i32 = arith.constant 0 : i32
    %c0_i32_0 = arith.constant 0 : i32
    return %arg0, %c0_i32 : i32, i32
  }
  func.func @transform_3(%arg0: i32) -> (i32, i32) {
    %c0_i32 = arith.constant 0 : i32
    %c0_i32_0 = arith.constant 0 : i32
    return %arg0, %c0_i32 : i32, i32
  }
  func.func @transform_4(%arg0: i32) -> (i32, i32) {
    %c0_i32 = arith.constant 0 : i32
    %c0_i32_0 = arith.constant 0 : i32
    return %arg0, %c0_i32 : i32, i32
  }
  func.func @transform_5(%arg0: i32) -> (i32, i32, i32) {
    %c0_i32 = arith.constant 0 : i32
    %c0_i32_0 = arith.constant 0 : i32
    %c0_i32_1 = arith.constant 0 : i32
    return %arg0, %c0_i32, %c0_i32_0 : i32, i32, i32
  }
}

</mosaic_0001>

<llo_original>
// kernel: ce_with_triplet_loss.1
$region0: #{ce_with_triplet_loss.1}
  #allocation0 [shape = 'u32[]', space=smem, size = 0x4, offset = 0x4, fixed_abs, tag = 'smem constant byte address 0x4 - core index']
  #allocation1 [shape = 'u32[144,128]{1,0:T(1,128)}', space=vmem, size = 0x12000, scoped, tag = 'internal scratch']
  %s0 = inlined_call_operand.vmem [shape: f32[8,10], index: 0, kind: input, shape index: {}]
  %s1 = inlined_call_operand.vmem [shape: s32[8,1], index: 1, kind: input, shape index: {}]
  %s2 = inlined_call_operand.vmem [shape: f32[8,32], index: 2, kind: input, shape index: {}]
  %s3 = inlined_call_operand.vmem [shape: f32[8,32], index: 3, kind: input, shape index: {}]
  %s4 = inlined_call_operand.hbm [shape: f32[8,32], index: 4, kind: input, shape index: {}]
  %s5 = inlined_call_operand.vmem [shape: f32[1,8,128], index: 5, kind: output, shape index: {}]
  %s6 = sld [smem:[#allocation0]]
  $region34: #{ce_with_triplet_loss.1} parent=0
    _
  %s8 = ssub.s32 1, %s6
  %s9 = scalar_select 0, %s8, %s6
  $region1: #{ce_with_triplet_loss.1} parent=0
    #allocation2 [shape = 'u8[4096]{0}', space=vmem, size = 0x1000, scoped, tag = 'input window, operand 4, single buffered']
    #allocation3 [shape = 's32[1]{0}', space=sflag, size = 0x4, scoped, tag = 'scoped memory for ce_with_triplet_loss.1']
    %10 = vsyncpa [#allocation3], 0
    // Predicated region
    $region2: #{ce_with_triplet_loss.1} parent=1 // pred_check
      _
    $region3: #{ce_with_triplet_loss.1} parent=1 // pred_check_branch
      %12 = sbr.rel (0) target = $region5
    $region4: #{ce_with_triplet_loss.1} parent=1 // pred_region
      _
    $region5: #{ce_with_triplet_loss.1} parent=1 // pred_fallthru
      _
    // Predicated region
    $region6: #{ce_with_triplet_loss.1} parent=1 // pred_check
      _
    $region7: #{ce_with_triplet_loss.1} parent=1 // pred_check_branch
      %14 = sbr.rel (0) target = $region9
    $region8: #{ce_with_triplet_loss.1} parent=1 // pred_region
      _
    $region9: #{ce_with_triplet_loss.1} parent=1 // pred_fallthru
      _
    // Predicated region
    $region10: #{ce_with_triplet_loss.1} parent=1 // pred_check
      _
    $region11: #{ce_with_triplet_loss.1} parent=1 // pred_check_branch
      %16 = sbr.rel (0) target = $region13
    $region12: #{ce_with_triplet_loss.1} parent=1 // pred_region
      _
    $region13: #{ce_with_triplet_loss.1} parent=1 // pred_fallthru
      _
    // Predicated region
    $region14: #{ce_with_triplet_loss.1} parent=1 // pred_check
      _
    $region15: #{ce_with_triplet_loss.1} parent=1 // pred_check_branch
      %18 = sbr.rel (0) target = $region17
    $region16: #{ce_with_triplet_loss.1} parent=1 // pred_region
      _
    $region17: #{ce_with_triplet_loss.1} parent=1 // pred_fallthru
      _
    // Predicated region
    $region18: #{ce_with_triplet_loss.1} parent=1 // pred_check
      _
    $region19: #{ce_with_triplet_loss.1} parent=1 // pred_check_branch
      %20 = sbr.rel (0) target = $region21
    $region20: #{ce_with_triplet_loss.1} parent=1 // pred_region
      %s22 = ssub.s32 128, 128
      %23 = vsyncadd [#allocation3], %s22
      %s25 = sshll.u32 [#allocation2], 4
      %s26 = int_to_ptr.vmem [resolvable:$true] %s25
      %28 = dma.hbm_to_vmem [thread:$0]  %s4, 128, %s26, [#allocation3]
    $region21: #{ce_with_triplet_loss.1} parent=1 // pred_fallthru
      _
    // Predicated region
    $region22: #{ce_with_triplet_loss.1} parent=1 // pred_check
      _
    $region23: #{ce_with_triplet_loss.1} parent=1 // pred_check_branch
      %30 = sbr.rel (0) target = $region25
    $region24: #{ce_with_triplet_loss.1} parent=1 // pred_region
      %31 = dma.done [#allocation3], 128
    $region25: #{ce_with_triplet_loss.1} parent=1 // pred_fallthru
      _
    %v32 = vld [vmem:[%s0] sm:$0xff]
    %v33 = vld [vmem:[%s1] sm:$0xff]
    %vm34 = vcmask 80896
    %v35 = vsel %vm34, %v32, -inf
    %36 = vmax.xlane.f32.xlu0 %v35
    %v37 = vpop.xlane.xlu0 %36
    %v38 = vsub.f32 %v32, %v37
    %v39 = vmul.f32 %v38, 1.442695
    %v40 = vpow.pop %v39
    %v41 = vsel %vm34, %v40, 0.0
    %42 = vadd.xlane.f32.xlu0 %v41
    %v43 = vpop.xlane.xlu0 %42
    %v44 = vlaneseq
    %v45 = vand.u32 %v44, 127
    %46 = vset.pattern.permute.xlu0 0
    %47 = vperm.xlu0 %46, %v33
    %v48 = vpop.permute.xlu0 %47
    %vm49 = vcmp.eq.s32.totalorder %v45, %v48
    %v50 = vsel %vm49, %v32, 0.0
    %v51 = vsel %vm34, %v50, 0.0
    %52 = vadd.xlane.f32.xlu0 %v51
    %v53 = vpop.xlane.xlu0 %52
    %v54 = vlog2.pop %v43
    %v55 = vmul.f32 %v54, 0.6931472
    %v56 = vadd.f32 %v37, %v55
    %v57 = vsub.f32 %v56, %v53
    %v58 = vld [vmem:[%s2] sm:$0xff]
    %v59 = vld [vmem:[%s3] sm:$0xff]
    %v60 = vld [vmem:[#allocation2] sm:$0xff]
    %v61 = vsub.f32 %v58, %v59
    %v62 = vadd.f32 %v61, 1e-06
    %v63 = vmul.f32 %v62, %v62
    %vm64 = vcmask 261120
    %v65 = vsel %vm64, %v63, 0.0
    %66 = vadd.xlane.f32.xlu0 %v65
    %v67 = vpop.xlane.xlu0 %66
    %v68 = vrsqrt.pop %v67
    %v69 = vmul.f32 %v67, %v68
    %vm70 = vcmp.eq.f32.partialorder %v67, inf
    %v71 = vsel %vm70, %v67, %v69
    %vm72 = vcmp.eq.f32.partialorder %v67, 0.0
    %v73 = vand.u32 %v67, 2147483648
    %v74 = vsel %vm72, %v73, %v71
    %v75 = vsub.f32 %v58, %v60
    %v76 = vadd.f32 %v75, 1e-06
    %v77 = vmul.f32 %v76, %v76
    %v78 = vsel %vm64, %v77, 0.0
    %79 = vadd.xlane.f32.xlu0 %v78
    %v80 = vpop.xlane.xlu0 %79
    %v81 = vrsqrt.pop %v80
    %v82 = vmul.f32 %v80, %v81
    %vm83 = vcmp.eq.f32.partialorder %v80, inf
    %v84 = vsel %vm83, %v80, %v82
    %vm85 = vcmp.eq.f32.partialorder %v80, 0.0
    %v86 = vand.u32 %v80, 2147483648
    %v87 = vsel %vm85, %v86, %v84
    %v88 = vsub.f32 %v74, %v87
    %v89 = vadd.f32 %v88, 1.0
    %v90 = vmax.f32 %v89, 0.0
    %s91 = smul.u32 0, 8
    %v92 = vlaneseq
    %v93 = vshrl.u32 %v92, 7
    %v94 = vstv %s91
    %v95 = vadd.s32 %v94, %v93
    %vm96 = vcmp.lt.s32.totalorder %v95, 8
    %v97 = vadd.f32 %v57, %v90
    %v98 = vsel %vm96, %v97, 0.0
    %vm99 = vcmask 7168
    %v100 = vsel %vm99, %v98, 0.0
    %101 = vadd.xlane.f32.xlu0 %v100
    %v102 = vpop.xlane.xlu0 %101
    %v103 = vrot.slane %v102, 4
    %v104 = vadd.f32 %v102, %v103
    %v105 = vrot.slane %v104, 2
    %v106 = vadd.f32 %v104, %v105
    %v107 = vrot.slane %v106, 1
    %v108 = vadd.f32 %v106, %v107
    %s109 = vtos %v108
    %v110 = vstv %s109
    %111 = vst [vmem:[%s5] sm:$0xff] %v110
    // Predicated region
    $region26: #{ce_with_triplet_loss.1} parent=1 // pred_check
      _
    $region27: #{ce_with_triplet_loss.1} parent=1 // pred_check_branch
      %113 = sbr.rel (0) target = $region29
    $region28: #{ce_with_triplet_loss.1} parent=1 // pred_region
      _
    $region29: #{ce_with_triplet_loss.1} parent=1 // pred_fallthru
      _
    // Predicated region
    $region30: #{ce_with_triplet_loss.1} parent=1 // pred_check
      _
    $region31: #{ce_with_triplet_loss.1} parent=1 // pred_check_branch
      %115 = sbr.rel (0) target = $region33
    $region32: #{ce_with_triplet_loss.1} parent=1 // pred_region
      _
    $region33: #{ce_with_triplet_loss.1} parent=1 // pred_fallthru
      _
    %116 = vsyncpa [#allocation3], 1

</llo_original>
